<compile_context>
chip_gen: v7x
topology: tpu7x:2x2x1
jax: 0.10.0
libtpu: 0.0.40
codegen_flags: <defaults>
</compile_context>

<pallas_src>
import jax
import jax.numpy as jnp
from jax.experimental import pallas as pl
from jax.experimental.pallas import tpu as pltpu

STATE_VECTOR_SIZE = 19
HIDDEN1 = 128
HIDDEN2 = 256
ACTIONS_AVAILABLE = 4   # stand-in for args.actions_available
LANE = 128              # TPU lane width (output padded to this for dense stores)


def _round_up(x, m):
    return (x + m - 1) // m * m


def dqn_kernel(x_ref, w1_ref, b1_ref, w2_ref, b2_ref, w3_ref, b3_ref, o_ref):
    # fc1 + relu   (accumulate in f32; bias-add / relu in f32)
    h1 = jnp.dot(x_ref[...], w1_ref[...], preferred_element_type=jnp.float32)
    h1 = jnp.maximum(h1 + b1_ref[...], 0.0)
    # fc2 + relu
    h2 = jnp.dot(h1.astype(w2_ref.dtype), w2_ref[...],
                 preferred_element_type=jnp.float32)
    h2 = jnp.maximum(h2 + b2_ref[...], 0.0)
    # out (no activation) -- lane-dense (padded) output block
    o = jnp.dot(h2.astype(w3_ref.dtype), w3_ref[...],
                preferred_element_type=jnp.float32)
    o_ref[...] = (o + b3_ref[...]).astype(o_ref.dtype)


def dqn_forward(x, params, *, tb=512, use_bf16=False):
    """x: (B, 19) (or (B, ...) flattened) float32. Returns (B, n_actions) float32.

    use_bf16=True casts x and weights to bf16 (recommended on v6e/v7x); the
    matmul accumulate, bias-add and ReLU remain f32 on every generation.
    """
    # t.flatten(start_dim=1) — glue in plain JAX.
    x = x.reshape(x.shape[0], -1)
    B, F = x.shape
    w1, b1, w2, b2, w3, b3 = params
    n_actions = w3.shape[1]

    # ---- Lane-dense output: zero-pad final layer to a multiple of 128 lanes. ----
    n_out = _round_up(n_actions, LANE)
    w3p = jnp.zeros((w3.shape[0], n_out), w3.dtype).at[:, :n_actions].set(w3)
    b3p = jnp.zeros((1, n_out), b3.dtype).at[:, :n_actions].set(b3)

    # ---- dtype handling: bf16 feeds the MXU; biases stay f32. ----
    mxu_dtype = jnp.bfloat16 if use_bf16 else jnp.float32
    xc = x.astype(mxu_dtype)
    w1c = w1.astype(mxu_dtype)
    w2c = w2.astype(mxu_dtype)
    w3c = w3p.astype(mxu_dtype)
    b1c = b1.astype(jnp.float32)
    b2c = b2.astype(jnp.float32)
    b3c = b3p.astype(jnp.float32)

    # ---- Batch tiling: TB multiple of 8, pad B up to a grid multiple. ----
    TB = min(tb, max(8, _round_up(B, 8)))
    TB = _round_up(TB, 8)
    Bp = _round_up(B, TB)
    if Bp != B:
        xc = jnp.pad(xc, ((0, Bp - B), (0, 0)))
    grid = (Bp // TB,)

    const2 = lambda i: (0, 0)   # weights/biases: same block every step -> VMEM-resident

    bytes_accessed = (
        xc.size * xc.dtype.itemsize
        + sum(a.size * a.dtype.itemsize for a in (w1c, b1c, w2c, b2c, w3c, b3c))
        + Bp * n_out * 4
    )
    flops = 2 * Bp * (F * HIDDEN1 + HIDDEN1 * HIDDEN2 + HIDDEN2 * n_out)

    out = pl.pallas_call(
        dqn_kernel,
        out_shape=jax.ShapeDtypeStruct((Bp, n_out), jnp.float32),
        grid_spec=pltpu.PrefetchScalarGridSpec(
            num_scalar_prefetch=0,
            grid=grid,
            in_specs=[
                pl.BlockSpec((TB, F), lambda i: (i, 0)),       # x: streamed over batch
                pl.BlockSpec(w1c.shape, const2),
                pl.BlockSpec(b1c.shape, const2),
                pl.BlockSpec(w2c.shape, const2),
                pl.BlockSpec(b2c.shape, const2),
                pl.BlockSpec(w3c.shape, const2),
                pl.BlockSpec(b3c.shape, const2),
            ],
            out_specs=pl.BlockSpec((TB, n_out), lambda i: (i, 0)),
        ),
        compiler_params=pltpu.CompilerParams(
            dimension_semantics=("parallel",),   # megacore-shard the batch grid (v7x)
            vmem_limit_bytes=32 << 20,
        ),
        cost_estimate=pl.CostEstimate(
            flops=flops, transcendentals=0, bytes_accessed=bytes_accessed
        ),
    )(xc, w1c, b1c, w2c, b2c, w3c, b3c)

    # Slice away batch padding and the lane padding of the output layer.
    return out[:B, :n_actions]


def init_params(key):
    """Deterministic init mimicking nn.Linear's U(-1/sqrt(fan_in), 1/sqrt(fan_in)).
    Weights stored transposed vs torch.nn.Linear: (in_features, out_features)."""
    ks = jax.random.split(key, 6)

    def linear(kw, kb, fan_in, fan_out):
        bound = 1.0 / jnp.sqrt(jnp.float32(fan_in))
        w = jax.random.uniform(kw, (fan_in, fan_out), jnp.float32, -bound, bound)
        b = jax.random.uniform(kb, (1, fan_out), jnp.float32, -bound, bound)
        return w, b

    w1, b1 = linear(ks[0], ks[1], STATE_VECTOR_SIZE, HIDDEN1)
    w2, b2 = linear(ks[2], ks[3], HIDDEN1, HIDDEN2)
    w3, b3 = linear(ks[4], ks[5], HIDDEN2, ACTIONS_AVAILABLE)
    return (w1, b1, w2, b2, w3, b3)


def _ref_forward(x, params, mxu_dtype=jnp.float32):
    """Pure-JAX reference (with the same dtype quantization as the kernel path)."""
    w1, b1, w2, b2, w3, b3 = params
    xq = x.astype(mxu_dtype).astype(jnp.float32)
    w1q = w1.astype(mxu_dtype).astype(jnp.float32)
    w2q = w2.astype(mxu_dtype).astype(jnp.float32)
    w3q = w3.astype(mxu_dtype).astype(jnp.float32)
    h = jnp.maximum(xq @ w1q + b1, 0.0)
    h = jnp.maximum(h.astype(mxu_dtype).astype(jnp.float32) @ w2q + b2, 0.0)
    return h.astype(mxu_dtype).astype(jnp.float32) @ w3q + b3


if __name__ == "__main__":
    key = jax.random.PRNGKey(0)
    kx, kp = jax.random.split(key)
    params = init_params(kp)

    # --- Test 1: f32 path, ragged batch (exercises grid, batch padding, output slice) ---
    B = 37                      # not a multiple of 8 nor of TB -> padding path
    x = jax.random.normal(kx, (B, STATE_VECTOR_SIZE), dtype=jnp.float32)
    out = dqn_forward(x, params, tb=16, use_bf16=False)
    out = jax.block_until_ready(out)
    assert out.shape == (B, ACTIONS_AVAILABLE)
    ref = _ref_forward(x, params, jnp.float32)
    assert jnp.allclose(out, ref, atol=1e-4, rtol=1e-4), "f32 path mismatch"

    # --- Test 2: bf16 weights/activations (the v6e/v7x-recommended path) ---
    out_bf = dqn_forward(x, params, tb=16, use_bf16=True)
    out_bf = jax.block_until_ready(out_bf)
    ref_bf = _ref_forward(x, params, jnp.bfloat16)
    assert out_bf.shape == (B, ACTIONS_AVAILABLE)
    assert jnp.allclose(out_bf, ref_bf, atol=2e-3, rtol=2e-3), "bf16 path mismatch"

    print("KERNEL_OK")
</pallas_src>

<mosaic_0001>
module attributes {stable_mosaic.version = 11 : i64} {
  func.func @dqn_kernel(%arg0: i32, %arg1: memref<16x19xf32, #tpu.memory_space<vmem>>, %arg2: memref<19x128xf32, #tpu.memory_space<vmem>>, %arg3: memref<1x128xf32, #tpu.memory_space<vmem>>, %arg4: memref<128x256xf32, #tpu.memory_space<vmem>>, %arg5: memref<1x256xf32, #tpu.memory_space<vmem>>, %arg6: memref<256x128xf32, #tpu.memory_space<vmem>>, %arg7: memref<1x128xf32, #tpu.memory_space<vmem>>, %arg8: memref<16x128xf32, #tpu.memory_space<vmem>>) attributes {dimension_semantics = [#tpu.dimension_semantics<parallel>], iteration_bounds = array<i64: 3>, scalar_prefetch = 0 : i64, scratch_operands = 0 : i64, tpu.core_type = #tpu.core_type<tc>, window_params = [{transform_indices = @transform_0, window_bounds = array<i64: 16, 19>}, {pipeline_mode = #tpu.pipeline_mode<synchronous>, transform_indices = @transform_1, window_bounds = array<i64: 19, 128>}, {pipeline_mode = #tpu.pipeline_mode<synchronous>, transform_indices = @transform_2, window_bounds = array<i64: 1, 128>}, {pipeline_mode = #tpu.pipeline_mode<synchronous>, transform_indices = @transform_3, window_bounds = array<i64: 128, 256>}, {pipeline_mode = #tpu.pipeline_mode<synchronous>, transform_indices = @transform_4, window_bounds = array<i64: 1, 256>}, {pipeline_mode = #tpu.pipeline_mode<synchronous>, transform_indices = @transform_5, window_bounds = array<i64: 256, 128>}, {pipeline_mode = #tpu.pipeline_mode<synchronous>, transform_indices = @transform_6, window_bounds = array<i64: 1, 128>}, {transform_indices = @transform_7, window_bounds = array<i64: 16, 128>}]} {
    %c0 = arith.constant 0 : index
    %c0_0 = arith.constant 0 : index
    %0 = vector.load %arg1[%c0, %c0_0] : memref<16x19xf32, #tpu.memory_space<vmem>>, vector<16x19xf32>
    %c0_1 = arith.constant 0 : index
    %c0_2 = arith.constant 0 : index
    %1 = vector.load %arg2[%c0_1, %c0_2] : memref<19x128xf32, #tpu.memory_space<vmem>>, vector<19x128xf32>
    %cst = arith.constant dense<0.000000e+00> : vector<16x128xf32>
    %2 = tpu.matmul %0, %1, %cst {dimension_numbers = #tpu.dot_dimension_numbers<[1], [0], [0], [1], [0, 0, 1, 1], [], []>} : vector<16x19xf32>, vector<19x128xf32>, vector<16x128xf32> -> vector<16x128xf32>
    %c0_3 = arith.constant 0 : index
    %c0_4 = arith.constant 0 : index
    %3 = vector.load %arg3[%c0_3, %c0_4] : memref<1x128xf32, #tpu.memory_space<vmem>>, vector<1x128xf32>
    %4 = vector.broadcast %3 : vector<1x128xf32> to vector<16x128xf32>
    %5 = arith.addf %2, %4 : vector<16x128xf32>
    %cst_5 = arith.constant 0.000000e+00 : f32
    %6 = vector.broadcast %cst_5 : f32 to vector<16x128xf32>
    %7 = arith.maximumf %5, %6 : vector<16x128xf32>
    %c0_6 = arith.constant 0 : index
    %c0_7 = arith.constant 0 : index
    %8 = vector.load %arg4[%c0_6, %c0_7] : memref<128x256xf32, #tpu.memory_space<vmem>>, vector<128x256xf32>
    %cst_8 = arith.constant dense<0.000000e+00> : vector<16x256xf32>
    %9 = tpu.matmul %7, %8, %cst_8 {dimension_numbers = #tpu.dot_dimension_numbers<[1], [0], [0], [1], [0, 0, 1, 1], [], []>} : vector<16x128xf32>, vector<128x256xf32>, vector<16x256xf32> -> vector<16x256xf32>
    %c0_9 = arith.constant 0 : index
    %c0_10 = arith.constant 0 : index
    %10 = vector.load %arg5[%c0_9, %c0_10] : memref<1x256xf32, #tpu.memory_space<vmem>>, vector<1x256xf32>
    %11 = vector.broadcast %10 : vector<1x256xf32> to vector<16x256xf32>
    %12 = arith.addf %9, %11 : vector<16x256xf32>
    %cst_11 = arith.constant 0.000000e+00 : f32
    %13 = vector.broadcast %cst_11 : f32 to vector<16x256xf32>
    %14 = arith.maximumf %12, %13 : vector<16x256xf32>
    %c0_12 = arith.constant 0 : index
    %c0_13 = arith.constant 0 : index
    %15 = vector.load %arg6[%c0_12, %c0_13] : memref<256x128xf32, #tpu.memory_space<vmem>>, vector<256x128xf32>
    %cst_14 = arith.constant dense<0.000000e+00> : vector<16x128xf32>
    %16 = tpu.matmul %14, %15, %cst_14 {dimension_numbers = #tpu.dot_dimension_numbers<[1], [0], [0], [1], [0, 0, 1, 1], [], []>} : vector<16x256xf32>, vector<256x128xf32>, vector<16x128xf32> -> vector<16x128xf32>
    %c0_15 = arith.constant 0 : index
    %c0_16 = arith.constant 0 : index
    %17 = vector.load %arg7[%c0_15, %c0_16] : memref<1x128xf32, #tpu.memory_space<vmem>>, vector<1x128xf32>
    %18 = vector.broadcast %17 : vector<1x128xf32> to vector<16x128xf32>
    %19 = arith.addf %16, %18 : vector<16x128xf32>
    %c0_17 = arith.constant 0 : index
    %c0_18 = arith.constant 0 : index
    %20 = vector.load %arg8[%c0_17, %c0_18] : memref<16x128xf32, #tpu.memory_space<vmem>>, vector<16x128xf32>
    tpu.vector_store %arg8[%c0_17, %c0_18], %19 {strides = array<i32>} : memref<16x128xf32, #tpu.memory_space<vmem>>, vector<16x128xf32>,
    return
  }
  func.func @transform_0(%arg0: i32) -> (i32, i32) {
    %c0_i32 = arith.constant 0 : i32
    %c0_i32_0 = arith.constant 0 : i32
    return %arg0, %c0_i32 : i32, i32
  }
  func.func @transform_1(%arg0: i32) -> (i32, i32) {
    %c0_i32 = arith.constant 0 : i32
    %c0_i32_0 = arith.constant 0 : i32
    %c0_i32_1 = arith.constant 0 : i32
    return %c0_i32, %c0_i32_0 : i32, i32
  }
  func.func @transform_2(%arg0: i32) -> (i32, i32) {
    %c0_i32 = arith.constant 0 : i32
    %c0_i32_0 = arith.constant 0 : i32
    %c0_i32_1 = arith.constant 0 : i32
    return %c0_i32, %c0_i32_0 : i32, i32
  }
  func.func @transform_3(%arg0: i32) -> (i32, i32) {
    %c0_i32 = arith.constant 0 : i32
    %c0_i32_0 = arith.constant 0 : i32
    %c0_i32_1 = arith.constant 0 : i32
    return %c0_i32, %c0_i32_0 : i32, i32
  }
  func.func @transform_4(%arg0: i32) -> (i32, i32) {
    %c0_i32 = arith.constant 0 : i32
    %c0_i32_0 = arith.constant 0 : i32
    %c0_i32_1 = arith.constant 0 : i32
    return %c0_i32, %c0_i32_0 : i32, i32
  }
  func.func @transform_5(%arg0: i32) -> (i32, i32) {
    %c0_i32 = arith.constant 0 : i32
    %c0_i32_0 = arith.constant 0 : i32
    %c0_i32_1 = arith.constant 0 : i32
    return %c0_i32, %c0_i32_0 : i32, i32
  }
  func.func @transform_6(%arg0: i32) -> (i32, i32) {
    %c0_i32 = arith.constant 0 : i32
    %c0_i32_0 = arith.constant 0 : i32
    %c0_i32_1 = arith.constant 0 : i32
    return %c0_i32, %c0_i32_0 : i32, i32
  }
  func.func @transform_7(%arg0: i32) -> (i32, i32) {
    %c0_i32 = arith.constant 0 : i32
    %c0_i32_0 = arith.constant 0 : i32
    return %arg0, %c0_i32 : i32, i32
  }
}

</mosaic_0001>

<llo_original>
// kernel: tpu_custom_call.1
$region0: #{tpu_custom_call.1}
  #allocation0 [shape = 'u32[]', space=smem, size = 0x4, offset = 0x4, fixed_abs, tag = 'smem constant byte address 0x4 - core index']
  #allocation1 [shape = 'u32[144,128]{1,0:T(1,128)}', space=vmem, size = 0x12000, scoped, tag = 'internal scratch']
  %s0 = inlined_call_operand.vmem [shape: f32[48,19], index: 0, kind: input, shape index: {}]
  %s1 = inlined_call_operand.vmem [shape: f32[19,128], index: 1, kind: input, shape index: {}]
  %s2 = inlined_call_operand.vmem [shape: f32[1,128], index: 2, kind: input, shape index: {}]
  %s3 = inlined_call_operand.hbm [shape: f32[128,256], index: 3, kind: input, shape index: {}]
  %s4 = inlined_call_operand.vmem [shape: f32[1,256], index: 4, kind: input, shape index: {}]
  %s5 = inlined_call_operand.hbm [shape: f32[256,128], index: 5, kind: input, shape index: {}]
  %s6 = inlined_call_operand.vmem [shape: f32[1,128], index: 6, kind: input, shape index: {}]
  %s7 = inlined_call_operand.hbm [shape: f32[48,128], index: 7, kind: output, shape index: {}]
  %s8 = sld [smem:[#allocation0]]
  $region69: #{tpu_custom_call.1} parent=0
    _
  %s10 = ssub.s32 1, %s8
  %s11 = scalar_select 0, %s10, %s8
  $region1: #{tpu_custom_call.1} parent=0
    #allocation2 [shape = 'u8[131072]{0}', space=vmem, size = 0x20000, scoped, tag = 'input window, operand 3, single buffered']
    #allocation3 [shape = 's32[2]{0}', space=sflag, size = 0x8, scoped, tag = 'scoped memory for tpu_custom_call.1']
    #allocation4 [shape = 's32[2]{0}', space=sflag, size = 0x8, scoped, tag = 'scoped memory for tpu_custom_call.1']
    #allocation5 [shape = 'u8[131072]{0}', space=vmem, size = 0x20000, scoped, tag = 'input window, operand 5, single buffered']
    #allocation6 [shape = 's32[1]{0}', space=sflag, size = 0x4, scoped, tag = 'scoped memory for tpu_custom_call.1']
    #allocation7 [shape = 'u8[16384]{0}', space=vmem, size = 0x4000, scoped, tag = 'output window, operand 0']
    %12 = vsyncpa [#allocation3], 0
    %13 = vsyncpa [#allocation6], 0
    %14 = vsyncpa [#allocation4], 0
    %s15 = scalar_lea.sflag [#allocation4], 1
    %16 = vsyncpa %s15, 0
    loop: start=0, step=1, limit=5
    $region2: #{tpu_custom_call.1} parent=1 // loop_pre_header
      _
    $region3: #{tpu_custom_call.1} parent=1 // loop_header
      %s18 = sphi 0, %s22
      %p19 = scmp.ge.s32.totalorder %s18, 5
      %s28 = sphi 0, %s30
      %s31 = sphi 0, %s28
      %s32 = sphi 0, %s31
      %s48 = sphi 0, %s32
      %s52 = sphi 0, %s52
      %s54 = sphi 0, %s52
      %s55 = sphi 0, %s54
      %s69 = sphi 0, %s55
      %s73 = sphi 0, %s73
      %s75 = sphi 0, %s73
      %s76 = sphi 0, %s75
      %s90 = sphi 0, %s76
      %s94 = sphi 0, %s94
      %s96 = sphi 0, %s94
      %s97 = sphi 0, %s96
      %s111 = sphi 0, %s97
      %s115 = sphi 0, %s115
      %s117 = sphi 0, %s115
      %s118 = sphi 0, %s117
      %s132 = sphi 0, %s118
      %s136 = sphi 0, %s136
      %s138 = sphi 0, %s136
      %s139 = sphi 0, %s138
      %s153 = sphi 0, %s139
      %s157 = sphi 0, %s157
      %s159 = sphi 0, %s157
      %s160 = sphi 0, %s159
      %s174 = sphi 0, %s160
      %s180 = sphi 0, %s182
      %s183 = sphi 0, %s180
      %s184 = sphi 0, %s183
      %s200 = sphi 0, %s184
    $region4: #{tpu_custom_call.1} parent=1 // loop_header_branch
      %21 = sbr.rel (%p19) target = $region8
    $region5: #{tpu_custom_call.1} parent=1 // loop_body
      %s23 = ssub.s32 %s18, 1
      %s24 = ssub.s32 %s18, 2
      %s25 = sadd.s32 %s18, 1
      %s26 = ssub.s32 %s18, %s25
      %p27 = scmp.eq.s32.totalorder %s26, 0
      %s29 = sadd.s32 %s28, 1
      %s30 = scalar_select %p27, %s28, %s29
      %p33 = pneg %p27
      %p34 = scmp.eq.s32.totalorder %s18, 2
      %p35 = por %p33, %p34
      %p36 = scmp.ne.s32.totalorder %s28, %s31
      %p37 = scmp.eq.s32.totalorder %s18, 0
      %p38 = por %p36, %p37
      %p39 = scmp.ne.s32.totalorder %s28, %s31
      %p40 = scmp.eq.s32.totalorder %s23, 2
      %p41 = por %p39, %p40
      %p42 = scmp.ne.s32.totalorder %s31, %s32
      %p43 = scmp.eq.s32.totalorder %s23, 0
      %p44 = por %p42, %p43
      %p45 = scmp.ne.s32.totalorder %s31, %s32
      %p46 = scmp.eq.s32.totalorder %s24, 2
      %p47 = por %p45, %p46
      %p49 = scmp.ne.s32.totalorder %s32, %s48
      %p50 = scmp.eq.s32.totalorder %s24, 0
      %p51 = por %p49, %p50
      %s53 = sadd.s32 %s52, 1
      %p56 = scmp.eq.s32.totalorder %s18, 2
      %p57 = scmp.ne.s32.totalorder %s52, %s54
      %p58 = scmp.eq.s32.totalorder %s18, 0
      %p59 = por %p57, %p58
      %p60 = scmp.ne.s32.totalorder %s52, %s54
      %p61 = scmp.eq.s32.totalorder %s23, 2
      %p62 = por %p60, %p61
      %p63 = scmp.ne.s32.totalorder %s54, %s55
      %p64 = scmp.eq.s32.totalorder %s23, 0
      %p65 = por %p63, %p64
      %p66 = scmp.ne.s32.totalorder %s54, %s55
      %p67 = scmp.eq.s32.totalorder %s24, 2
      %p68 = por %p66, %p67
      %p70 = scmp.ne.s32.totalorder %s55, %s69
      %p71 = scmp.eq.s32.totalorder %s24, 0
      %p72 = por %p70, %p71
      %s74 = sadd.s32 %s73, 1
      %p77 = scmp.eq.s32.totalorder %s18, 2
      %p78 = scmp.ne.s32.totalorder %s73, %s75
      %p79 = scmp.eq.s32.totalorder %s18, 0
      %p80 = por %p78, %p79
      %p81 = scmp.ne.s32.totalorder %s73, %s75
      %p82 = scmp.eq.s32.totalorder %s23, 2
      %p83 = por %p81, %p82
      %p84 = scmp.ne.s32.totalorder %s75, %s76
      %p85 = scmp.eq.s32.totalorder %s23, 0
      %p86 = por %p84, %p85
      %p87 = scmp.ne.s32.totalorder %s75, %s76
      %p88 = scmp.eq.s32.totalorder %s24, 2
      %p89 = por %p87, %p88
      %p91 = scmp.ne.s32.totalorder %s76, %s90
      %p92 = scmp.eq.s32.totalorder %s24, 0
      %p93 = por %p91, %p92
      %s95 = sadd.s32 %s94, 1
      %p98 = scmp.eq.s32.totalorder %s18, 2
      %p99 = scmp.ne.s32.totalorder %s94, %s96
      %p100 = scmp.eq.s32.totalorder %s18, 0
      %p101 = por %p99, %p100
      %p102 = scmp.ne.s32.totalorder %s94, %s96
      %p103 = scmp.eq.s32.totalorder %s23, 2
      %p104 = por %p102, %p103
      %p105 = scmp.ne.s32.totalorder %s96, %s97
      %p106 = scmp.eq.s32.totalorder %s23, 0
      %p107 = por %p105, %p106
      %p108 = scmp.ne.s32.totalorder %s96, %s97
      %p109 = scmp.eq.s32.totalorder %s24, 2
      %p110 = por %p108, %p109
      %p112 = scmp.ne.s32.totalorder %s97, %s111
      %p113 = scmp.eq.s32.totalorder %s24, 0
      %p114 = por %p112, %p113
      %s116 = sadd.s32 %s115, 1
      %p119 = scmp.eq.s32.totalorder %s18, 2
      %p120 = scmp.ne.s32.totalorder %s115, %s117
      %p121 = scmp.eq.s32.totalorder %s18, 0
      %p122 = por %p120, %p121
      %p123 = scmp.ne.s32.totalorder %s115, %s117
      %p124 = scmp.eq.s32.totalorder %s23, 2
      %p125 = por %p123, %p124
      %p126 = scmp.ne.s32.totalorder %s117, %s118
      %p127 = scmp.eq.s32.totalorder %s23, 0
      %p128 = por %p126, %p127
      %p129 = scmp.ne.s32.totalorder %s117, %s118
      %p130 = scmp.eq.s32.totalorder %s24, 2
      %p131 = por %p129, %p130
      %p133 = scmp.ne.s32.totalorder %s118, %s132
      %p134 = scmp.eq.s32.totalorder %s24, 0
      %p135 = por %p133, %p134
      %s137 = sadd.s32 %s136, 1
      %p140 = scmp.eq.s32.totalorder %s18, 2
      %p141 = scmp.ne.s32.totalorder %s136, %s138
      %p142 = scmp.eq.s32.totalorder %s18, 0
      %p143 = por %p141, %p142
      %p144 = scmp.ne.s32.totalorder %s136, %s138
      %p145 = scmp.eq.s32.totalorder %s23, 2
      %p146 = por %p144, %p145
      %p147 = scmp.ne.s32.totalorder %s138, %s139
      %p148 = scmp.eq.s32.totalorder %s23, 0
      %p149 = por %p147, %p148
      %p150 = scmp.ne.s32.totalorder %s138, %s139
      %p151 = scmp.eq.s32.totalorder %s24, 2
      %p152 = por %p150, %p151
      %p154 = scmp.ne.s32.totalorder %s139, %s153
      %p155 = scmp.eq.s32.totalorder %s24, 0
      %p156 = por %p154, %p155
      %s158 = sadd.s32 %s157, 1
      %p161 = scmp.eq.s32.totalorder %s18, 2
      %p162 = scmp.ne.s32.totalorder %s157, %s159
      %p163 = scmp.eq.s32.totalorder %s18, 0
      %p164 = por %p162, %p163
      %p165 = scmp.ne.s32.totalorder %s157, %s159
      %p166 = scmp.eq.s32.totalorder %s23, 2
      %p167 = por %p165, %p166
      %p168 = scmp.ne.s32.totalorder %s159, %s160
      %p169 = scmp.eq.s32.totalorder %s23, 0
      %p170 = por %p168, %p169
      %p171 = scmp.ne.s32.totalorder %s159, %s160
      %p172 = scmp.eq.s32.totalorder %s24, 2
      %p173 = por %p171, %p172
      %p175 = scmp.ne.s32.totalorder %s160, %s174
      %p176 = scmp.eq.s32.totalorder %s24, 0
      %p177 = por %p175, %p176
      %s178 = ssub.s32 %s18, %s25
      %p179 = scmp.eq.s32.totalorder %s178, 0
      %s181 = sadd.s32 %s180, 1
      %s182 = scalar_select %p179, %s180, %s181
      %p185 = pneg %p179
      %p186 = scmp.eq.s32.totalorder %s18, 2
      %p187 = por %p185, %p186
      %p188 = scmp.ne.s32.totalorder %s180, %s183
      %p189 = scmp.eq.s32.totalorder %s18, 0
      %p190 = por %p188, %p189
      %p191 = scmp.ne.s32.totalorder %s180, %s183
      %p192 = scmp.eq.s32.totalorder %s23, 2
      %p193 = por %p191, %p192
      %p194 = scmp.ne.s32.totalorder %s183, %s184
      %p195 = scmp.eq.s32.totalorder %s23, 0
      %p196 = por %p194, %p195
      %p197 = scmp.ne.s32.totalorder %s183, %s184
      %p198 = scmp.eq.s32.totalorder %s24, 2
      %p199 = por %p197, %p198
      %p201 = scmp.ne.s32.totalorder %s184, %s200
      %p202 = scmp.eq.s32.totalorder %s24, 0
      %p203 = por %p201, %p202
      %p204 = scmp.le.s32.totalorder 1, %s18
      %p205 = scmp.lt.s32.totalorder %s18, 4
      %p206 = pnand %p204, %p205
      %p207 = pneg %p206
      // Predicated region
      $region9: #{tpu_custom_call.1} parent=5 // pred_check
        _
      $region10: #{tpu_custom_call.1} parent=5 // pred_check_branch
        %209 = sbr.rel (%p206) target = $region12
      $region11: #{tpu_custom_call.1} parent=5 // pred_region
        %s210 = ssub.s32 %s18, 1
        // Predicated region
        $region13: #{tpu_custom_call.1} parent=11 // pred_check
          %p211 = pneg %p65
        $region14: #{tpu_custom_call.1} parent=11 // pred_check_branch
          %213 = sbr.rel (%p211) target = $region16
        $region15: #{tpu_custom_call.1} parent=11 // pred_region
          _
        $region16: #{tpu_custom_call.1} parent=11 // pred_fallthru
          _
        // Predicated region
        $region17: #{tpu_custom_call.1} parent=11 // pred_check
          %p214 = pneg %p86
        $region18: #{tpu_custom_call.1} parent=11 // pred_check_branch
          %216 = sbr.rel (%p214) target = $region20
        $region19: #{tpu_custom_call.1} parent=11 // pred_region
          _
        $region20: #{tpu_custom_call.1} parent=11 // pred_fallthru
          _
        // Predicated region
        $region21: #{tpu_custom_call.1} parent=11 // pred_check
          %p217 = pneg %p107
        $region22: #{tpu_custom_call.1} parent=11 // pred_check_branch
          %219 = sbr.rel (%p217) target = $region24
        $region23: #{tpu_custom_call.1} parent=11 // pred_region
          %s221 = ssub.s32 4096, 4096
          %222 = vsyncadd [#allocation3], %s221
          %s223 = sshll.u32 [#allocation2], 4
          %s224 = int_to_ptr.vmem [resolvable:$true] %s223
          %229 = dma.hbm_to_vmem [thread:$0]  %s3, 4096, %s224, [#allocation3], 256, 256, 16
        $region24: #{tpu_custom_call.1} parent=11 // pred_fallthru
          _
        // Predicated region
        $region25: #{tpu_custom_call.1} parent=11 // pred_check
          %p230 = pneg %p128
        $region26: #{tpu_custom_call.1} parent=11 // pred_check_branch
          %232 = sbr.rel (%p230) target = $region28
        $region27: #{tpu_custom_call.1} parent=11 // pred_region
          _
        $region28: #{tpu_custom_call.1} parent=11 // pred_fallthru
          _
        // Predicated region
        $region29: #{tpu_custom_call.1} parent=11 // pred_check
          %p233 = pneg %p149
        $region30: #{tpu_custom_call.1} parent=11 // pred_check_branch
          %235 = sbr.rel (%p233) target = $region32
        $region31: #{tpu_custom_call.1} parent=11 // pred_region
          %s237 = ssub.s32 4096, 4096
          %238 = vsyncadd [#allocation6], %s237
          %s239 = sshll.u32 [#allocation5], 4
          %s240 = int_to_ptr.vmem [resolvable:$true] %s239
          %245 = dma.hbm_to_vmem [thread:$0]  %s5, 4096, %s240, [#allocation6], 128, 128, 8
        $region32: #{tpu_custom_call.1} parent=11 // pred_fallthru
          _
        // Predicated region
        $region33: #{tpu_custom_call.1} parent=11 // pred_check
          %p246 = pneg %p170
        $region34: #{tpu_custom_call.1} parent=11 // pred_check_branch
          %248 = sbr.rel (%p246) target = $region36
        $region35: #{tpu_custom_call.1} parent=11 // pred_region
          _
        $region36: #{tpu_custom_call.1} parent=11 // pred_fallthru
          _
      $region12: #{tpu_custom_call.1} parent=5 // pred_fallthru
        _
      %p249 = scmp.lt.s32.totalorder %s18, 3
      // Predicated region
      $region37: #{tpu_custom_call.1} parent=5 // pred_check
        %p250 = pneg %p249
      $region38: #{tpu_custom_call.1} parent=5 // pred_check_branch
        %252 = sbr.rel (%p250) target = $region40
      $region39: #{tpu_custom_call.1} parent=5 // pred_region
        // Predicated region
        $region41: #{tpu_custom_call.1} parent=39 // pred_check
          %p253 = pneg %p38
        $region42: #{tpu_custom_call.1} parent=39 // pred_check_branch
          %255 = sbr.rel (%p253) target = $region44
        $region43: #{tpu_custom_call.1} parent=39 // pred_region
          %s256 = smul.u32 2, %s18
          %p257 = scmp.lt.s32.totalorder %s256, 5
          %s258 = scalar_select %p257, %s256, 5
          %s259 = smul.addr %s258, 8
          %s260 = scalar_lea.vmem %s0, %s259
          %s261 = smul.u32 2, %s18
        $region44: #{tpu_custom_call.1} parent=39 // pred_fallthru
          _
      $region40: #{tpu_custom_call.1} parent=5 // pred_fallthru
        _
      %p262 = scmp.le.s32.totalorder 1, %s18
      %p263 = scmp.lt.s32.totalorder %s18, 4
      %p264 = pnand %p262, %p263
      %p265 = pneg %p264
      // Predicated region
      $region45: #{tpu_custom_call.1} parent=5 // pred_check
        _
      $region46: #{tpu_custom_call.1} parent=5 // pred_check_branch
        %267 = sbr.rel (%p264) target = $region48
      $region47: #{tpu_custom_call.1} parent=5 // pred_region
        %s268 = ssub.s32 %s18, 1
        // Predicated region
        $region49: #{tpu_custom_call.1} parent=47 // pred_check
          %p269 = pneg %p107
        $region50: #{tpu_custom_call.1} parent=47 // pred_check_branch
          %271 = sbr.rel (%p269) target = $region52
        $region51: #{tpu_custom_call.1} parent=47 // pred_region
          %272 = dma.done [#allocation3], 4096
        $region52: #{tpu_custom_call.1} parent=47 // pred_fallthru
          _
        // Predicated region
        $region53: #{tpu_custom_call.1} parent=47 // pred_check
          %p273 = pneg %p149
        $region54: #{tpu_custom_call.1} parent=47 // pred_check_branch
          %275 = sbr.rel (%p273) target = $region56
        $region55: #{tpu_custom_call.1} parent=47 // pred_region
          %276 = dma.done [#allocation6], 4096
        $region56: #{tpu_custom_call.1} parent=47 // pred_fallthru
          _
        %s277 = smul.u32 2, %s23
        %p278 = scmp.lt.s32.totalorder %s277, 5
        %s279 = scalar_select %p278, %s277, 5
        %s280 = smul.addr %s279, 8
        %s281 = scalar_lea.vmem %s0, %s280
        %p282 = pneg %p44
        %p283 = pneg %p41
        %p284 = pneg %p65
        %p285 = pneg %p62
        %p286 = pneg %p86
        %p287 = pneg %p83
        %p288 = pneg %p107
        %p289 = pneg %p104
        %p290 = pneg %p128
        %p291 = pneg %p125
        %p292 = pneg %p149
        %p293 = pneg %p146
        %p294 = pneg %p170
        %p295 = pneg %p167
        %p296 = pneg %p196
        %p297 = pneg %p193
        %s298 = sand.u32 %s183, 1
        %s299 = scalar_lea.sflag [#allocation4], %s298
        %s300 = sand.u32 %s183, 1
        %s301 = smul.addr %s300, 16
        %s302 = scalar_lea.vmem [#allocation7], %s301
        %s303 = smul.u32 2, %s23
        %p304 = scmp.lt.s32.totalorder %s303, 5
        %s305 = scalar_select %p304, %s303, 5
        %s306 = smul.addr %s305, 8
        %s307 = scalar_lea.vmem %s0, %s306
        %s308 = smul.u32 2, %s23
        %s309 = smul.u32 2, %s23
        %v310 = vld [vmem:[%s307] sm:$0xff]
        %v311 = vld [vmem:[%s307 + $0x8] sm:$0xff]
        %v312 = vld [vmem:[%s1] sm:$0xff]
        %v313 = vld [vmem:[%s1 + $0x8] sm:$0xff]
        %v314 = vld [vmem:[%s1 + $0x10] sm:$0x7]
        %v315 = vld [vmem:[%s2] sm:$0x1]
        %v317 = vlaneseq
        %v318 = vshrl.u32 %v317, 7
        %v319 = vsub.s32 0, %v318
        %v320 = vrot.slane %v315, %v319
        %vm322 = vcmask 154624
        %v324 = vsel %vm322, %v310, 0
        %v327 = vsel %vm322, %v311, 0
        %vm329 = vcmask 1042432
        %v331 = vsel %vm329, %v314, 0
        %333 = vmatprep.subr.mxu0 0.0
        %334 = vmatpush1.msra.mxu0 %v312
        %335 = vmatprep.subr.mxu0 0.0
        %336 = vmatpush1.msra.mxu0 %v313
        %337 = vmatprep.subr.mxu0 0.0
        %338 = vmatpush1.msra.mxu0 %v331
        %339 = vmatprep.subr.mxu0 0.0
        %340 = vmatpush1.msra.mxu0 0.0
        %341 = vmatprep.subr.mxu0 0.0
        %342 = vmatpush1.msra.mxu0 0.0
        %343 = vmatprep.subr.mxu0 0.0
        %344 = vmatpush1.msra.mxu0 0.0
        %345 = vmatprep.subr.mxu0 0.0
        %346 = vmatpush1.msra.mxu0 0.0
        %347 = vmatprep.subr.mxu0 0.0
        %348 = vmatpush1.msra.mxu0 0.0
        %349 = vmatprep.subr.mxu0 0.0
        %350 = vmatpush1.msra.mxu0 0.0
        %351 = vmatprep.subr.mxu0 0.0
        %352 = vmatpush1.msra.mxu0 0.0
        %353 = vmatprep.subr.mxu0 0.0
        %354 = vmatpush1.msra.mxu0 0.0
        %355 = vmatprep.subr.mxu0 0.0
        %356 = vmatpush1.msra.mxu0 0.0
        %357 = vmatprep.subr.mxu0 0.0
        %358 = vmatpush1.msra.mxu0 0.0
        %359 = vmatprep.subr.mxu0 0.0
        %360 = vmatpush1.msra.mxu0 0.0
        %361 = vmatprep.subr.mxu0 0.0
        %362 = vmatpush1.msra.mxu0 0.0
        %363 = vmatprep.subr.mxu0 0.0
        %364 = vmatpush1.msra.mxu0 0.0
        %365 = vmatprep.subr.mxu0 0.0
        %366 = vmatpush1.msra.mxu0 0.0
        %367 = vmatprep.subr.mxu0 0.0
        %368 = vmatpush1.msra.mxu0 0.0
        %369 = vmatprep.subr.mxu0 0.0
        %370 = vmatpush1.msra.mxu0 0.0
        %371 = vmatprep.subr.mxu0 0.0
        %372 = vmatpush1.msra.mxu0 0.0
        %373 = vmatprep.subr.mxu0 0.0
        %374 = vmatpush1.msra.mxu0 0.0
        %375 = vmatprep.subr.mxu0 0.0
        %376 = vmatpush1.msra.mxu0 0.0
        %377 = vmatprep.subr.mxu0 0.0
        %378 = vmatpush1.msra.mxu0 0.0
        %379 = vmatprep.subr.mxu0 0.0
        %380 = vmatpush1.msra.mxu0 0.0
        %381 = vmatprep.subr.mxu0 0.0
        %382 = vmatpush1.msra.mxu0 0.0
        %383 = vmatprep.subr.mxu0 0.0
        %384 = vmatpush1.msra.mxu0 0.0
        %385 = vmatprep.subr.mxu0 0.0
        %386 = vmatpush1.msra.mxu0 0.0
        %387 = vmatprep.subr.mxu0 0.0
        %388 = vmatpush1.msra.mxu0 0.0
        %389 = vmatprep.subr.mxu0 0.0
        %390 = vmatpush1.msra.mxu0 0.0
        %391 = vmatprep.subr.mxu0 0.0
        %392 = vmatpush1.msra.mxu0 0.0
        %393 = vmatprep.subr.mxu0 0.0
        %394 = vmatpush1.msra.mxu0 0.0
        %395 = vmatprep.subr.mxu0 0.0
        %396 = vmatpush1.msra.mxu0 0.0
        %397 = vmatprep.mubr.f32.mxu0 0.0
        %398 = vmatmul.mubr.f32.gmra.mrb[0].mxu0 %v324
        %v399 = vpop.f32.mrb[0].mxu0
        %v400 = vadd.f32 %v320, %v399
        %v401 = vpop.f32.mrb[0].mxu0
        %402 = vmatprep.mubr.f32.mxu0 0.0
        %403 = vmatmul.mubr.f32.gmra.mrb[0].mxu0 %v327
        %v404 = vpop.f32.mrb[0].mxu0
        %v405 = vadd.f32 %v320, %v404
        %v406 = vpop.f32.mrb[0].mxu0
        %407 = vdwg.mxu0
        %v408 = vmax.f32 %v400, 0.0
        %v409 = vmax.f32 %v405, 0.0
        %v410 = vld [vmem:[#allocation2] sm:$0xff]
        %v411 = vld [vmem:[#allocation2 + $0x8] sm:$0xff]
        %v412 = vld [vmem:[#allocation2 + $0x10] sm:$0xff]
        %v413 = vld [vmem:[#allocation2 + $0x18] sm:$0xff]
        %v414 = vld [vmem:[#allocation2 + $0x20] sm:$0xff]
        %v415 = vld [vmem:[#allocation2 + $0x28] sm:$0xff]
        %v416 = vld [vmem:[#allocation2 + $0x30] sm:$0xff]
        %v417 = vld [vmem:[#allocation2 + $0x38] sm:$0xff]
        %v418 = vld [vmem:[#allocation2 + $0x40] sm:$0xff]
        %v419 = vld [vmem:[#allocation2 + $0x48] sm:$0xff]
        %v420 = vld [vmem:[#allocation2 + $0x50] sm:$0xff]
        %v421 = vld [vmem:[#allocation2 + $0x58] sm:$0xff]
        %v422 = vld [vmem:[#allocation2 + $0x60] sm:$0xff]
        %v423 = vld [vmem:[#allocation2 + $0x68] sm:$0xff]
        %v424 = vld [vmem:[#allocation2 + $0x70] sm:$0xff]
        %v425 = vld [vmem:[#allocation2 + $0x78] sm:$0xff]
        %v426 = vld [vmem:[#allocation2 + $0x80] sm:$0xff]
        %v427 = vld [vmem:[#allocation2 + $0x88] sm:$0xff]
        %v428 = vld [vmem:[#allocation2 + $0x90] sm:$0xff]
        %v429 = vld [vmem:[#allocation2 + $0x98] sm:$0xff]
        %v430 = vld [vmem:[#allocation2 + $0xa0] sm:$0xff]
        %v431 = vld [vmem:[#allocation2 + $0xa8] sm:$0xff]
        %v432 = vld [vmem:[#allocation2 + $0xb0] sm:$0xff]
        %v433 = vld [vmem:[#allocation2 + $0xb8] sm:$0xff]
        %v434 = vld [vmem:[#allocation2 + $0xc0] sm:$0xff]
        %v435 = vld [vmem:[#allocation2 + $0xc8] sm:$0xff]
        %v436 = vld [vmem:[#allocation2 + $0xd0] sm:$0xff]
        %v437 = vld [vmem:[#allocation2 + $0xd8] sm:$0xff]
        %v438 = vld [vmem:[#allocation2 + $0xe0] sm:$0xff]
        %v439 = vld [vmem:[#allocation2 + $0xe8] sm:$0xff]
        %v440 = vld [vmem:[#allocation2 + $0xf0] sm:$0xff]
        %v441 = vld [vmem:[#allocation2 + $0xf8] sm:$0xff]
        %v442 = vld [vmem:[%s4] sm:$0x3]
        %v444 = vlaneseq
        %v445 = vshrl.u32 %v444, 7
        %v446 = vsub.s32 0, %v445
        %v447 = vrot.slane %v442, %v446
        %v448 = vlaneseq
        %v449 = vshrl.u32 %v448, 7
        %v450 = vsub.s32 1, %v449
        %v451 = vrot.slane %v442, %v450
        %454 = vmatprep.subr.mxu0 %v411
        %455 = vmatpush1.msra.mxu0 %v410
        %456 = vmatprep.subr.mxu0 %v413
        %457 = vmatpush1.msra.mxu0 %v412
        %458 = vmatprep.subr.mxu0 %v415
        %459 = vmatpush1.msra.mxu0 %v414
        %460 = vmatprep.subr.mxu0 %v417
        %461 = vmatpush1.msra.mxu0 %v416
        %462 = vmatprep.subr.mxu0 %v419
        %463 = vmatpush1.msra.mxu0 %v418
        %464 = vmatprep.subr.mxu0 %v421
        %465 = vmatpush1.msra.mxu0 %v420
        %466 = vmatprep.subr.mxu0 %v423
        %467 = vmatpush1.msra.mxu0 %v422
        %468 = vmatprep.subr.mxu0 %v425
        %469 = vmatpush1.msra.mxu0 %v424
        %470 = vmatprep.subr.mxu0 %v427
        %471 = vmatpush1.msra.mxu0 %v426
        %472 = vmatprep.subr.mxu0 %v429
        %473 = vmatpush1.msra.mxu0 %v428
        %474 = vmatprep.subr.mxu0 %v431
        %475 = vmatpush1.msra.mxu0 %v430
        %476 = vmatprep.subr.mxu0 %v433
        %477 = vmatpush1.msra.mxu0 %v432
        %478 = vmatprep.subr.mxu0 %v435
        %479 = vmatpush1.msra.mxu0 %v434
        %480 = vmatprep.subr.mxu0 %v437
        %481 = vmatpush1.msra.mxu0 %v436
        %482 = vmatprep.subr.mxu0 %v439
        %483 = vmatpush1.msra.mxu0 %v438
        %484 = vmatprep.subr.mxu0 %v441
        %485 = vmatpush1.msra.mxu0 %v440
        %486 = vmatprep.subr.mxu0 0.0
        %487 = vmatpush1.msra.mxu0 0.0
        %488 = vmatprep.subr.mxu0 0.0
        %489 = vmatpush1.msra.mxu0 0.0
        %490 = vmatprep.subr.mxu0 0.0
        %491 = vmatpush1.msra.mxu0 0.0
        %492 = vmatprep.subr.mxu0 0.0
        %493 = vmatpush1.msra.mxu0 0.0
        %494 = vmatprep.subr.mxu0 0.0
        %495 = vmatpush1.msra.mxu0 0.0
        %496 = vmatprep.subr.mxu0 0.0
        %497 = vmatpush1.msra.mxu0 0.0
        %498 = vmatprep.subr.mxu0 0.0
        %499 = vmatpush1.msra.mxu0 0.0
        %500 = vmatprep.subr.mxu0 0.0
        %501 = vmatpush1.msra.mxu0 0.0
        %502 = vmatprep.subr.mxu0 0.0
        %503 = vmatpush1.msra.mxu0 0.0
        %504 = vmatprep.subr.mxu0 0.0
        %505 = vmatpush1.msra.mxu0 0.0
        %506 = vmatprep.subr.mxu0 0.0
        %507 = vmatpush1.msra.mxu0 0.0
        %508 = vmatprep.subr.mxu0 0.0
        %509 = vmatpush1.msra.mxu0 0.0
        %510 = vmatprep.subr.mxu0 0.0
        %511 = vmatpush1.msra.mxu0 0.0
        %512 = vmatprep.subr.mxu0 0.0
        %513 = vmatpush1.msra.mxu0 0.0
        %514 = vmatprep.subr.mxu0 0.0
        %515 = vmatpush1.msra.mxu0 0.0
        %516 = vmatprep.subr.mxu0 0.0
        %517 = vmatpush1.msra.mxu0 0.0
        %518 = vmatprep.mubr.f32.mxu0 0.0
        %519 = vmatmul.mubr.f32.gmra.mrb[0].mxu0 %v408
        %v520 = vpop.f32.mrb[0].mxu0
        %v521 = vadd.f32 %v447, %v520
        %v522 = vpop.f32.mrb[0].mxu0
        %v523 = vadd.f32 %v451, %v522
        %524 = vmatprep.mubr.f32.mxu0 0.0
        %525 = vmatmul.mubr.f32.gmra.mrb[0].mxu0 %v409
        %v526 = vpop.f32.mrb[0].mxu0
        %v527 = vadd.f32 %v447, %v526
        %v528 = vpop.f32.mrb[0].mxu0
        %v529 = vadd.f32 %v451, %v528
        %530 = vdwg.mxu0
        %v531 = vmax.f32 %v521, 0.0
        %v532 = vmax.f32 %v523, 0.0
        %v533 = vmax.f32 %v527, 0.0
        %v534 = vmax.f32 %v529, 0.0
        %v535 = vld [vmem:[#allocation5] sm:$0xff]
        %v536 = vld [vmem:[#allocation5 + $0x8] sm:$0xff]
        %v537 = vld [vmem:[#allocation5 + $0x10] sm:$0xff]
        %v538 = vld [vmem:[#allocation5 + $0x18] sm:$0xff]
        %v539 = vld [vmem:[#allocation5 + $0x20] sm:$0xff]
        %v540 = vld [vmem:[#allocation5 + $0x28] sm:$0xff]
        %v541 = vld [vmem:[#allocation5 + $0x30] sm:$0xff]
        %v542 = vld [vmem:[#allocation5 + $0x38] sm:$0xff]
        %v543 = vld [vmem:[#allocation5 + $0x40] sm:$0xff]
        %v544 = vld [vmem:[#allocation5 + $0x48] sm:$0xff]
        %v545 = vld [vmem:[#allocation5 + $0x50] sm:$0xff]
        %v546 = vld [vmem:[#allocation5 + $0x58] sm:$0xff]
        %v547 = vld [vmem:[#allocation5 + $0x60] sm:$0xff]
        %v548 = vld [vmem:[#allocation5 + $0x68] sm:$0xff]
        %v549 = vld [vmem:[#allocation5 + $0x70] sm:$0xff]
        %v550 = vld [vmem:[#allocation5 + $0x78] sm:$0xff]
        %v551 = vld [vmem:[#allocation5 + $0x80] sm:$0xff]
        %v552 = vld [vmem:[#allocation5 + $0x88] sm:$0xff]
        %v553 = vld [vmem:[#allocation5 + $0x90] sm:$0xff]
        %v554 = vld [vmem:[#allocation5 + $0x98] sm:$0xff]
        %v555 = vld [vmem:[#allocation5 + $0xa0] sm:$0xff]
        %v556 = vld [vmem:[#allocation5 + $0xa8] sm:$0xff]
        %v557 = vld [vmem:[#allocation5 + $0xb0] sm:$0xff]
        %v558 = vld [vmem:[#allocation5 + $0xb8] sm:$0xff]
        %v559 = vld [vmem:[#allocation5 + $0xc0] sm:$0xff]
        %v560 = vld [vmem:[#allocation5 + $0xc8] sm:$0xff]
        %v561 = vld [vmem:[#allocation5 + $0xd0] sm:$0xff]
        %v562 = vld [vmem:[#allocation5 + $0xd8] sm:$0xff]
        %v563 = vld [vmem:[#allocation5 + $0xe0] sm:$0xff]
        %v564 = vld [vmem:[#allocation5 + $0xe8] sm:$0xff]
        %v565 = vld [vmem:[#allocation5 + $0xf0] sm:$0xff]
        %v566 = vld [vmem:[#allocation5 + $0xf8] sm:$0xff]
        %v567 = vld [vmem:[%s6] sm:$0x1]
        %v569 = vlaneseq
        %v570 = vshrl.u32 %v569, 7
        %v571 = vsub.s32 0, %v570
        %v572 = vrot.slane %v567, %v571
        %574 = vmatprep.subr.mxu0 0.0
        %575 = vmatpush1.msra.mxu0 %v535
        %576 = vmatprep.subr.mxu0 0.0
        %577 = vmatpush1.msra.mxu0 %v536
        %578 = vmatprep.subr.mxu0 0.0
        %579 = vmatpush1.msra.mxu0 %v537
        %580 = vmatprep.subr.mxu0 0.0
        %581 = vmatpush1.msra.mxu0 %v538
        %582 = vmatprep.subr.mxu0 0.0
        %583 = vmatpush1.msra.mxu0 %v539
        %584 = vmatprep.subr.mxu0 0.0
        %585 = vmatpush1.msra.mxu0 %v540
        %586 = vmatprep.subr.mxu0 0.0
        %587 = vmatpush1.msra.mxu0 %v541
        %588 = vmatprep.subr.mxu0 0.0
        %589 = vmatpush1.msra.mxu0 %v542
        %590 = vmatprep.subr.mxu0 0.0
        %591 = vmatpush1.msra.mxu0 %v543
        %592 = vmatprep.subr.mxu0 0.0
        %593 = vmatpush1.msra.mxu0 %v544
        %594 = vmatprep.subr.mxu0 0.0
        %595 = vmatpush1.msra.mxu0 %v545
        %596 = vmatprep.subr.mxu0 0.0
        %597 = vmatpush1.msra.mxu0 %v546
        %598 = vmatprep.subr.mxu0 0.0
        %599 = vmatpush1.msra.mxu0 %v547
        %600 = vmatprep.subr.mxu0 0.0
        %601 = vmatpush1.msra.mxu0 %v548
        %602 = vmatprep.subr.mxu0 0.0
        %603 = vmatpush1.msra.mxu0 %v549
        %604 = vmatprep.subr.mxu0 0.0
        %605 = vmatpush1.msra.mxu0 %v550
        %606 = vmatprep.subr.mxu0 0.0
        %607 = vmatpush1.msra.mxu0 %v551
        %608 = vmatprep.subr.mxu0 0.0
        %609 = vmatpush1.msra.mxu0 %v552
        %610 = vmatprep.subr.mxu0 0.0
        %611 = vmatpush1.msra.mxu0 %v553
        %612 = vmatprep.subr.mxu0 0.0
        %613 = vmatpush1.msra.mxu0 %v554
        %614 = vmatprep.subr.mxu0 0.0
        %615 = vmatpush1.msra.mxu0 %v555
        %616 = vmatprep.subr.mxu0 0.0
        %617 = vmatpush1.msra.mxu0 %v556
        %618 = vmatprep.subr.mxu0 0.0
        %619 = vmatpush1.msra.mxu0 %v557
        %620 = vmatprep.subr.mxu0 0.0
        %621 = vmatpush1.msra.mxu0 %v558
        %622 = vmatprep.subr.mxu0 0.0
        %623 = vmatpush1.msra.mxu0 %v559
        %624 = vmatprep.subr.mxu0 0.0
        %625 = vmatpush1.msra.mxu0 %v560
        %626 = vmatprep.subr.mxu0 0.0
        %627 = vmatpush1.msra.mxu0 %v561
        %628 = vmatprep.subr.mxu0 0.0
        %629 = vmatpush1.msra.mxu0 %v562
        %630 = vmatprep.subr.mxu0 0.0
        %631 = vmatpush1.msra.mxu0 %v563
        %632 = vmatprep.subr.mxu0 0.0
        %633 = vmatpush1.msra.mxu0 %v564
        %634 = vmatprep.subr.mxu0 0.0
        %635 = vmatpush1.msra.mxu0 %v565
        %636 = vmatprep.subr.mxu0 0.0
        %637 = vmatpush1.msra.mxu0 %v566
        %638 = vmatprep.mubr.f32.mxu0 %v532
        %639 = vmatmul.mubr.f32.gmra.mrb[0].mxu0 %v531
        %v640 = vpop.f32.mrb[0].mxu0
        %v641 = vadd.f32 %v572, %v640
        %v642 = vpop.f32.mrb[0].mxu0
        %643 = vmatprep.mubr.f32.mxu0 %v534
        %644 = vmatmul.mubr.f32.gmra.mrb[0].mxu0 %v533
        %v645 = vpop.f32.mrb[0].mxu0
        %v646 = vadd.f32 %v572, %v645
        %v647 = vpop.f32.mrb[0].mxu0
        %648 = vdwg.mxu0
        %649 = vst [vmem:[%s302] sm:$0xff] %v641
        %650 = vst [vmem:[%s302 + $0x8] sm:$0xff] %v646
        %s651 = sand.u32 %s183, 1
        %s652 = scalar_lea.sflag [#allocation4], %s651
        %s653 = sand.u32 %s183, 1
        %s654 = smul.addr %s653, 16
        %s655 = scalar_lea.vmem [#allocation7], %s654
        // Predicated region
        $region57: #{tpu_custom_call.1} parent=47 // pred_check
          %p656 = pneg %p193
        $region58: #{tpu_custom_call.1} parent=47 // pred_check_branch
          %658 = sbr.rel (%p656) target = $region60
        $region59: #{tpu_custom_call.1} parent=47 // pred_region
          %s659 = smul.u32 2, %s23
          %s661 = ssub.s32 256, 256
          %662 = vsyncadd %s652, %s661
          %s663 = smul.addr %s659, 128
          %s664 = scalar_lea.hbm %s7, %s663
          %s665 = sshll.u32 %s655, 4
          %s666 = int_to_ptr.vmem [resolvable:$true] %s665
          %671 = dma.vmem_to_hbm [thread:$0]  %s666, 256, %s664, %s652, 128, 128, 8
        $region60: #{tpu_custom_call.1} parent=47 // pred_fallthru
          _
      $region48: #{tpu_custom_call.1} parent=5 // pred_fallthru
        _
      %p672 = scmp.le.s32.totalorder 2, %s18
      // Predicated region
      $region61: #{tpu_custom_call.1} parent=5 // pred_check
        %p673 = pneg %p672
      $region62: #{tpu_custom_call.1} parent=5 // pred_check_branch
        %675 = sbr.rel (%p673) target = $region64
      $region63: #{tpu_custom_call.1} parent=5 // pred_region
        %s676 = ssub.s32 %s18, 2
        // Predicated region
        $region65: #{tpu_custom_call.1} parent=63 // pred_check
          %p677 = pneg %p199
        $region66: #{tpu_custom_call.1} parent=63 // pred_check_branch
          %679 = sbr.rel (%p677) target = $region68
        $region67: #{tpu_custom_call.1} parent=63 // pred_region
          %s680 = sand.u32 %s184, 1
          %s681 = scalar_lea.sflag [#allocation4], %s680
          %s682 = sand.u32 %s184, 1
          %s683 = smul.addr %s682, 16
          %s684 = scalar_lea.vmem [#allocation7], %s683
          %685 = dma.done %s681, 256
        $region68: #{tpu_custom_call.1} parent=63 // pred_fallthru
          _
      $region64: #{tpu_custom_call.1} parent=5 // pred_fallthru
        _
    $region6: #{tpu_custom_call.1} parent=1 // loop_footer
      %s22 = sadd.s32 1, %s18
    $region7: #{tpu_custom_call.1} parent=1 // loop_footer_branch
      %17 = sbr.rel target = $region3
    $region8: #{tpu_custom_call.1} parent=1 // loop_exit
      _
    %686 = vsyncpa [#allocation3], 1
    %s687 = scalar_lea.sflag [#allocation3], 1
    %688 = vsyncpa %s687, 1
    %689 = vsyncpa [#allocation6], 1
    %690 = vsyncpa [#allocation4], 1
    %s691 = scalar_lea.sflag [#allocation4], 1
    %692 = vsyncpa %s691, 1

</llo_original>
